<compile_context>
chip_gen: v5e
topology: v5e:2x2
jax: 0.10.0
libtpu: 0.0.40
codegen_flags: <defaults>
</compile_context>

<pallas_src>
import functools

import jax
import jax.numpy as jnp
from jax.experimental import pallas as pl
from jax.experimental.pallas import tpu as pltpu

_LN_EPS = 1e-5


def _round_up(x, m):
    return ((x + m - 1) // m) * m


# --------------------------------------------------------------------------
# Shared epilogue: bias add -> LayerNorm(out_dim) -> Mish, all in f32.
# --------------------------------------------------------------------------
def _ln_mish_epilogue(y, p, n_valid):
    """y: (M, n_pad) f32 matmul result; p: (3, n_pad) f32 [bias, gamma, beta]."""
    n_pad = y.shape[-1]
    y = y + p[0:1, :]                                  # bias
    masked = n_pad != n_valid
    if masked:
        mask = jax.lax.broadcasted_iota(jnp.int32, (1, n_pad), 1) < n_valid
        y = jnp.where(mask, y, 0.0)

    inv_n = 1.0 / float(n_valid)
    mean = jnp.sum(y, axis=-1, keepdims=True) * inv_n
    d = y - mean                                       # two-pass (centered) moments
    if masked:
        d = jnp.where(mask, d, 0.0)
    var = jnp.sum(d * d, axis=-1, keepdims=True) * inv_n
    yn = d * jax.lax.rsqrt(var + _LN_EPS)
    yn = yn * p[1:2, :] + p[2:3, :]                    # gamma, beta

    # Mish: yn * tanh(softplus(yn)) == yn * n / (n + 2), n = t*(t+2),
    # t = exp(min(yn, 20)).  The clamp matches PyTorch's softplus threshold.
    # NOTE: approx EUP reciprocal adds ~1e-3-level relative error (inference-ok).
    t = jnp.exp(jnp.minimum(yn, 20.0))
    n = t * (t + 2.0)
    return yn * (n * pl.reciprocal(n + 2.0, approx=True))


# --------------------------------------------------------------------------
# Kernels
# --------------------------------------------------------------------------
def _mlp_block_kernel(x_ref, w_ref, p_ref, o_ref, *, n_valid):
    """Resident-weight variant: one grid axis over batch tiles."""
    y = jnp.dot(x_ref[...], w_ref[...], preferred_element_type=jnp.float32)
    o_ref[...] = _ln_mish_epilogue(
        y, p_ref[...].astype(jnp.float32), n_valid).astype(o_ref.dtype)


def _mlp_block_ksplit_kernel(x_ref, w_ref, p_ref, o_ref, acc_ref, *, n_valid):
    """K-split variant: grid = (batch tiles, K chunks), f32 accumulator."""
    k = pl.program_id(1)

    @pl.when(k == 0)
    def _():
        acc_ref[...] = jnp.zeros_like(acc_ref)

    acc_ref[...] += jnp.dot(x_ref[...], w_ref[...],
                            preferred_element_type=jnp.float32)

    @pl.when(k == pl.num_programs(1) - 1)
    def _():
        o_ref[...] = _ln_mish_epilogue(
            acc_ref[...], p_ref[...].astype(jnp.float32), n_valid
        ).astype(o_ref.dtype)


# --------------------------------------------------------------------------
# Tiling / VMEM planning
# --------------------------------------------------------------------------
def _vmem_budget_and_limit():
    cap = 64 << 20                       # conservative default: v7x per-TC VMEM
    try:
        cap = int(pltpu.get_tpu_info().vmem_capacity_bytes)
    except Exception:
        pass
    budget = int(cap * 0.55)             # what the tile picker may plan against
    limit = min(int(cap * 0.75), 96 << 20)   # scoped limit handed to Mosaic
    return budget, limit


def _pick_tile_b(B, bytes_per_row, tile_budget, *, min_steps=4, max_tile=2048):
    """Largest multiple-of-8 row tile fitting the budget, preferring
    >= min_steps grid steps (2 per TC on v7x megacore) and MXU-shaped tiles."""
    ub = max(8, min(max_tile, _round_up(B, 8)))
    cands = [t for t in range(8, ub + 1, 8) if t * bytes_per_row <= tile_budget]
    if not cands:
        return 8

    def pick(ts):
        for align in (256, 128):         # v6e/v7x MXU is 256x256, v5e is 128x128
            aligned = [t for t in ts if t % align == 0]
            if aligned:
                return max(aligned)
        return max(ts)

    multi = [t for t in cands if pl.cdiv(B, t) >= min_steps]
    return pick(multi) if multi else pick(cands)


# --------------------------------------------------------------------------
# Wrapper
# --------------------------------------------------------------------------
def mlp_block(x, w_t, bias, gamma, beta, *, tile_b=None, tile_k=None,
              mxu_dtype=None, use_ksplit=None):
    """Fused Linear -> LayerNorm(out_dim) -> Mish.

    x: (B, inp_dim); w_t: (inp_dim, out_dim) == PyTorch Linear.weight.T;
    bias/gamma/beta: (out_dim,).
    mxu_dtype: optional (e.g. jnp.bfloat16) cast of matmul operands only;
        accumulation and the LN/Mish epilogue stay f32, output keeps x.dtype.
    """
    B, inp_dim = x.shape
    assert w_t.shape[0] == inp_dim
    out_dim = w_t.shape[1]
    out_dtype = x.dtype

    if mxu_dtype is not None:
        x = x.astype(mxu_dtype)
        w_t = w_t.astype(mxu_dtype)

    x_itemsize = jnp.dtype(x.dtype).itemsize
    w_itemsize = jnp.dtype(w_t.dtype).itemsize
    o_itemsize = jnp.dtype(out_dtype).itemsize

    budget, vmem_limit = _vmem_budget_and_limit()

    # Lane-dense output: pad features to a multiple of 128 (unmasked vst on
    # writeback).  Padded weight columns / params are zero and the LN moments
    # mask them out in-kernel.
    N = _round_up(out_dim, 128)
    if N != out_dim:
        pad_n = N - out_dim
        w_t = jnp.pad(w_t, ((0, 0), (0, pad_n)))
        bias = jnp.pad(bias, (0, pad_n))
        gamma = jnp.pad(gamma, (0, pad_n))
        beta = jnp.pad(beta, (0, pad_n))
    params = jnp.stack([bias, gamma, beta], axis=0).astype(jnp.float32)

    weight_bytes = inp_dim * N * w_itemsize
    if use_ksplit is None:
        # Split K when a single-buffered resident weight would eat more than
        # ~1/4 of the planning budget (hits first on v7x's 64 MiB VMEM).
        use_ksplit = weight_bytes > budget // 4

    if use_ksplit:
        if tile_k is None:
            k_cap = max(128, ((budget // 4) // (2 * N * w_itemsize)) // 128 * 128)
            tile_k = min(k_cap, _round_up(inp_dim, 128))
        assert tile_k % 128 == 0
        K = _round_up(inp_dim, tile_k)
        if K != inp_dim:
            x = jnp.pad(x, ((0, 0), (0, K - inp_dim)))
            w_t = jnp.pad(w_t, ((0, K - inp_dim), (0, 0)))
        fixed_bytes = 2 * tile_k * N * w_itemsize + params.size * 4
        bytes_per_row = (2 * tile_k * x_itemsize   # x block, double-buffered
                         + 2 * N * o_itemsize      # out block, double-buffered
                         + N * 4                   # f32 accumulator scratch
                         + 6 * N * 4)              # f32 epilogue temporaries
    else:
        K = inp_dim
        tile_k = inp_dim
        fixed_bytes = weight_bytes + params.size * 4   # single-buffered weight
        bytes_per_row = (2 * inp_dim * x_itemsize
                         + 2 * N * o_itemsize
                         + 6 * N * 4)

    if tile_b is None:
        tile_b = _pick_tile_b(B, bytes_per_row, budget - fixed_bytes)
    assert tile_b % 8 == 0

    B_pad = _round_up(B, tile_b)
    if B_pad != B:
        x = jnp.pad(x, ((0, B_pad - B), (0, 0)))
    grid_b = B_pad // tile_b

    cost = pl.CostEstimate(
        flops=2 * B_pad * K * N,
        transcendentals=2 * B_pad * N + B_pad,   # exp + recip per elem, rsqrt per row
        bytes_accessed=(x.size * x_itemsize + w_t.size * w_itemsize
                        + params.size * 4 + B_pad * N * o_itemsize),
    )

    def build(single_buffer_consts):
        const_kw = ({"pipeline_mode": pl.Buffered(1)}
                    if single_buffer_consts else {})
        if use_ksplit:
            grid = (grid_b, K // tile_k)
            in_specs = [
                pl.BlockSpec((tile_b, tile_k), lambda i, k: (i, k)),
                pl.BlockSpec((tile_k, N), lambda i, k: (k, 0)),
                pl.BlockSpec((3, N), lambda i, k: (0, 0), **const_kw),
            ]
            out_specs = pl.BlockSpec((tile_b, N), lambda i, k: (i, 0))
            scratch = [pltpu.VMEM((tile_b, N), jnp.float32)]
            kernel = functools.partial(_mlp_block_ksplit_kernel, n_valid=out_dim)
            dim_sem = ("parallel", "arbitrary")
        else:
            grid = (grid_b,)
            in_specs = [
                pl.BlockSpec((tile_b, K), lambda i: (i, 0)),
                pl.BlockSpec((K, N), lambda i: (0, 0), **const_kw),
                pl.BlockSpec((3, N), lambda i: (0, 0), **const_kw),
            ]
            out_specs = pl.BlockSpec((tile_b, N), lambda i: (i, 0))
            scratch = []
            kernel = functools.partial(_mlp_block_kernel, n_valid=out_dim)
            dim_sem = ("parallel",)
        return pl.pallas_call(
            kernel,
            out_shape=jax.ShapeDtypeStruct((B_pad, N), out_dtype),
            grid_spec=pltpu.PrefetchScalarGridSpec(
                num_scalar_prefetch=0,
                grid=grid,
                in_specs=in_specs,
                out_specs=out_specs,
                scratch_shapes=scratch,
            ),
            compiler_params=pltpu.CompilerParams(
                dimension_semantics=dim_sem,
                vmem_limit_bytes=vmem_limit,
            ),
            cost_estimate=cost,
        )

    try:
        out = build(True)(x, w_t, params)
    except Exception:
        # pl.Buffered(1) unsupported on this jax version: fall back to default
        # double-buffering.  The ~20% budget/limit headroom covers the extra
        # constant-block buffers in the resident-weight regime.
        out = build(False)(x, w_t, params)

    return out[:B, :out_dim]


def reference(x, w_t, bias, gamma, beta):
    """Pure-JAX reference matching the PyTorch module (f32 math, exact mish)."""
    y = jnp.dot(x.astype(jnp.float32), w_t.astype(jnp.float32)) + bias
    mean = jnp.mean(y, axis=-1, keepdims=True)
    var = jnp.mean((y - mean) ** 2, axis=-1, keepdims=True)
    yn = (y - mean) * jax.lax.rsqrt(var + _LN_EPS) * gamma + beta
    return yn * jnp.tanh(jax.nn.softplus(yn))


if __name__ == "__main__":
    key = jax.random.PRNGKey(0)

    def torch_init(k, inp_dim, out_dim):
        # nn.Linear default init: U(-1/sqrt(inp_dim), 1/sqrt(inp_dim)); LN affine default.
        kw, kb = jax.random.split(k)
        bound = 1.0 / (inp_dim ** 0.5)
        w = jax.random.uniform(kw, (out_dim, inp_dim), jnp.float32, -bound, bound)
        b = jax.random.uniform(kb, (out_dim,), jnp.float32, -bound, bound)
        return (jnp.asarray(w.T), b,
                jnp.ones((out_dim,), jnp.float32), jnp.zeros((out_dim,), jnp.float32))

    # 1) f32, resident-weight path, lane-dense out_dim = 128
    B, inp_dim, out_dim = 64, 32, 128
    k0, k1, key = jax.random.split(key, 3)
    x = jax.random.normal(k0, (B, inp_dim), jnp.float32)
    w_t, bias, gamma, beta = torch_init(k1, inp_dim, out_dim)
    out = jax.block_until_ready(mlp_block(x, w_t, bias, gamma, beta))
    ref = reference(x, w_t, bias, gamma, beta)
    assert out.shape == (B, out_dim)
    assert jnp.allclose(out, ref, atol=5e-3, rtol=5e-3), float(jnp.max(jnp.abs(out - ref)))

    # 2) bf16 MXU operands (f32 accumulation + f32 epilogue); output stays f32
    out_bf = jax.block_until_ready(
        mlp_block(x, w_t, bias, gamma, beta, mxu_dtype=jnp.bfloat16))
    assert out_bf.dtype == jnp.float32
    assert jnp.allclose(out_bf, ref, atol=3e-2, rtol=3e-2)

    # 3) K-split path + non-multiple-of-128 out_dim (masked LN) + ragged batch
    B2, inp2, out2 = 36, 256, 96
    k2, k3, key = jax.random.split(key, 3)
    x2 = jax.random.normal(k2, (B2, inp2), jnp.float32)
    w2, b2, g2, be2 = torch_init(k3, inp2, out2)
    out2_v = jax.block_until_ready(
        mlp_block(x2, w2, b2, g2, be2, use_ksplit=True, tile_k=128))
    ref2 = reference(x2, w2, b2, g2, be2)
    assert out2_v.shape == (B2, out2)
    assert jnp.allclose(out2_v, ref2, atol=5e-3, rtol=5e-3), float(jnp.max(jnp.abs(out2_v - ref2)))

    print("KERNEL_OK")
</pallas_src>

<mosaic_0001>
module attributes {stable_mosaic.version = 11 : i64} {
  func.func @_mlp_block_kernel(%arg0: i32, %arg1: memref<16x32xf32, #tpu.memory_space<vmem>>, %arg2: memref<32x128xf32, #tpu.memory_space<vmem>>, %arg3: memref<3x128xf32, #tpu.memory_space<vmem>>, %arg4: memref<16x128xf32, #tpu.memory_space<vmem>>) attributes {dimension_semantics = [#tpu.dimension_semantics<parallel>], iteration_bounds = array<i64: 4>, scalar_prefetch = 0 : i64, scratch_operands = 0 : i64, tpu.core_type = #tpu.core_type<tc>, window_params = [{transform_indices = @transform_0, window_bounds = array<i64: 16, 32>}, {pipeline_mode = #tpu.pipeline_mode<synchronous>, transform_indices = @transform_1, window_bounds = array<i64: 32, 128>}, {pipeline_mode = #tpu.pipeline_mode<synchronous>, transform_indices = @transform_2, window_bounds = array<i64: 3, 128>}, {transform_indices = @transform_3, window_bounds = array<i64: 16, 128>}]} {
    %c0 = arith.constant 0 : index
    %c0_0 = arith.constant 0 : index
    %0 = vector.load %arg1[%c0, %c0_0] : memref<16x32xf32, #tpu.memory_space<vmem>>, vector<16x32xf32>
    %c0_1 = arith.constant 0 : index
    %c0_2 = arith.constant 0 : index
    %1 = vector.load %arg2[%c0_1, %c0_2] : memref<32x128xf32, #tpu.memory_space<vmem>>, vector<32x128xf32>
    %cst = arith.constant dense<0.000000e+00> : vector<16x128xf32>
    %2 = tpu.matmul %0, %1, %cst {dimension_numbers = #tpu.dot_dimension_numbers<[1], [0], [0], [1], [0, 0, 1, 1], [], []>} : vector<16x32xf32>, vector<32x128xf32>, vector<16x128xf32> -> vector<16x128xf32>
    %c0_3 = arith.constant 0 : index
    %c0_4 = arith.constant 0 : index
    %3 = vector.load %arg3[%c0_3, %c0_4] : memref<3x128xf32, #tpu.memory_space<vmem>>, vector<3x128xf32>
    %4 = vector.extract_strided_slice %3 {offsets = [0, 0], sizes = [1, 128], strides = [1, 1]} : vector<3x128xf32> to vector<1x128xf32>
    %5 = vector.broadcast %4 : vector<1x128xf32> to vector<16x128xf32>
    %6 = arith.addf %2, %5 : vector<16x128xf32>
    %cst_5 = arith.constant dense<0.000000e+00> : vector<16xf32>
    %7 = vector.multi_reduction <add>, %6, %cst_5 [1] : vector<16x128xf32> to vector<16xf32>
    %8 = vector.shape_cast %7 : vector<16xf32> to vector<16x1xf32>
    %cst_6 = arith.constant 7.812500e-03 : f32
    %9 = vector.broadcast %cst_6 : f32 to vector<16x1xf32>
    %10 = arith.mulf %8, %9 : vector<16x1xf32>
    %11 = vector.broadcast %10 : vector<16x1xf32> to vector<16x128xf32>
    %12 = arith.subf %6, %11 : vector<16x128xf32>
    %13 = arith.mulf %12, %12 : vector<16x128xf32>
    %cst_7 = arith.constant dense<0.000000e+00> : vector<16xf32>
    %14 = vector.multi_reduction <add>, %13, %cst_7 [1] : vector<16x128xf32> to vector<16xf32>
    %15 = vector.shape_cast %14 : vector<16xf32> to vector<16x1xf32>
    %cst_8 = arith.constant 7.812500e-03 : f32
    %16 = vector.broadcast %cst_8 : f32 to vector<16x1xf32>
    %17 = arith.mulf %15, %16 : vector<16x1xf32>
    %cst_9 = arith.constant 9.99999974E-6 : f32
    %18 = vector.broadcast %cst_9 : f32 to vector<16x1xf32>
    %19 = arith.addf %17, %18 : vector<16x1xf32>
    %20 = math.rsqrt %19 : vector<16x1xf32>
    %21 = vector.broadcast %20 : vector<16x1xf32> to vector<16x128xf32>
    %22 = arith.mulf %12, %21 : vector<16x128xf32>
    %23 = vector.extract_strided_slice %3 {offsets = [1, 0], sizes = [1, 128], strides = [1, 1]} : vector<3x128xf32> to vector<1x128xf32>
    %24 = vector.broadcast %23 : vector<1x128xf32> to vector<16x128xf32>
    %25 = arith.mulf %22, %24 : vector<16x128xf32>
    %26 = vector.extract_strided_slice %3 {offsets = [2, 0], sizes = [1, 128], strides = [1, 1]} : vector<3x128xf32> to vector<1x128xf32>
    %27 = vector.broadcast %26 : vector<1x128xf32> to vector<16x128xf32>
    %28 = arith.addf %25, %27 : vector<16x128xf32>
    %cst_10 = arith.constant 2.000000e+01 : f32
    %29 = vector.broadcast %cst_10 : f32 to vector<16x128xf32>
    %30 = arith.minimumf %28, %29 : vector<16x128xf32>
    %31 = math.exp %30 : vector<16x128xf32>
    %cst_11 = arith.constant 2.000000e+00 : f32
    %32 = vector.broadcast %cst_11 : f32 to vector<16x128xf32>
    %33 = arith.addf %31, %32 : vector<16x128xf32>
    %34 = arith.mulf %31, %33 : vector<16x128xf32>
    %cst_12 = arith.constant 2.000000e+00 : f32
    %35 = vector.broadcast %cst_12 : f32 to vector<16x128xf32>
    %36 = arith.addf %34, %35 : vector<16x128xf32>
    %37 = tpu.reciprocal %36 {approx = true} : vector<16x128xf32> -> vector<16x128xf32>
    %38 = arith.mulf %34, %37 : vector<16x128xf32>
    %39 = arith.mulf %28, %38 : vector<16x128xf32>
    %c0_13 = arith.constant 0 : index
    %c0_14 = arith.constant 0 : index
    %40 = vector.load %arg4[%c0_13, %c0_14] : memref<16x128xf32, #tpu.memory_space<vmem>>, vector<16x128xf32>
    tpu.vector_store %arg4[%c0_13, %c0_14], %39 {strides = array<i32>} : memref<16x128xf32, #tpu.memory_space<vmem>>, vector<16x128xf32>,
    return
  }
  func.func @transform_0(%arg0: i32) -> (i32, i32) {
    %c0_i32 = arith.constant 0 : i32
    %c0_i32_0 = arith.constant 0 : i32
    return %arg0, %c0_i32 : i32, i32
  }
  func.func @transform_1(%arg0: i32) -> (i32, i32) {
    %c0_i32 = arith.constant 0 : i32
    %c0_i32_0 = arith.constant 0 : i32
    %c0_i32_1 = arith.constant 0 : i32
    return %c0_i32, %c0_i32_0 : i32, i32
  }
  func.func @transform_2(%arg0: i32) -> (i32, i32) {
    %c0_i32 = arith.constant 0 : i32
    %c0_i32_0 = arith.constant 0 : i32
    %c0_i32_1 = arith.constant 0 : i32
    return %c0_i32, %c0_i32_0 : i32, i32
  }
  func.func @transform_3(%arg0: i32) -> (i32, i32) {
    %c0_i32 = arith.constant 0 : i32
    %c0_i32_0 = arith.constant 0 : i32
    return %arg0, %c0_i32 : i32, i32
  }
}

module attributes {stable_mosaic.version = 11 : i64} {
  func.func @_mlp_block_kernel(%arg0: i32, %arg1: memref<16x32xf32, #tpu.memory_space<vmem>>, %arg2: memref<32x128xf32, #tpu.memory_space<vmem>>, %arg3: memref<3x128xf32, #tpu.memory_space<vmem>>, %arg4: memref<16x128xf32, #tpu.memory_space<vmem>>) attributes {dimension_semantics = [#tpu.dimension_semantics<parallel>], iteration_bounds = array<i64: 4>, scalar_prefetch = 0 : i64, scratch_operands = 0 : i64, tpu.core_type = #tpu.core_type<tc>, window_params = [{transform_indices = @transform_0, window_bounds = array<i64: 16, 32>}, {pipeline_mode = #tpu.pipeline_mode<synchronous>, transform_indices = @transform_1, window_bounds = array<i64: 32, 128>}, {pipeline_mode = #tpu.pipeline_mode<synchronous>, transform_indices = @transform_2, window_bounds = array<i64: 3, 128>}, {transform_indices = @transform_3, window_bounds = array<i64: 16, 128>}]} {
    %c0 = arith.constant 0 : index
    %c0_0 = arith.constant 0 : index
    %0 = vector.load %arg1[%c0, %c0_0] : memref<16x32xf32, #tpu.memory_space<vmem>>, vector<16x32xf32>
    %c0_1 = arith.constant 0 : index
    %c0_2 = arith.constant 0 : index
    %1 = vector.load %arg2[%c0_1, %c0_2] : memref<32x128xf32, #tpu.memory_space<vmem>>, vector<32x128xf32>
    %cst = arith.constant dense<0.000000e+00> : vector<16x128xf32>
    %2 = tpu.matmul %0, %1, %cst {dimension_numbers = #tpu.dot_dimension_numbers<[1], [0], [0], [1], [0, 0, 1, 1], [], []>} : vector<16x32xf32>, vector<32x128xf32>, vector<16x128xf32> -> vector<16x128xf32>
    %c0_3 = arith.constant 0 : index
    %c0_4 = arith.constant 0 : index
    %3 = vector.load %arg3[%c0_3, %c0_4] : memref<3x128xf32, #tpu.memory_space<vmem>>, vector<3x128xf32>
    %4 = vector.extract_strided_slice %3 {offsets = [0, 0], sizes = [1, 128], strides = [1, 1]} : vector<3x128xf32> to vector<1x128xf32>
    %5 = vector.broadcast %4 : vector<1x128xf32> to vector<16x128xf32>
    %6 = arith.addf %2, %5 : vector<16x128xf32>
    %cst_5 = arith.constant dense<0.000000e+00> : vector<16xf32>
    %7 = vector.multi_reduction <add>, %6, %cst_5 [1] : vector<16x128xf32> to vector<16xf32>
    %8 = vector.shape_cast %7 : vector<16xf32> to vector<16x1xf32>
    %cst_6 = arith.constant 7.812500e-03 : f32
    %9 = vector.broadcast %cst_6 : f32 to vector<16x1xf32>
    %10 = arith.mulf %8, %9 : vector<16x1xf32>
    %11 = vector.broadcast %10 : vector<16x1xf32> to vector<16x128xf32>
    %12 = arith.subf %6, %11 : vector<16x128xf32>
    %13 = arith.mulf %12, %12 : vector<16x128xf32>
    %cst_7 = arith.constant dense<0.000000e+00> : vector<16xf32>
    %14 = vector.multi_reduction <add>, %13, %cst_7 [1] : vector<16x128xf32> to vector<16xf32>
    %15 = vector.shape_cast %14 : vector<16xf32> to vector<16x1xf32>
    %cst_8 = arith.constant 7.812500e-03 : f32
    %16 = vector.broadcast %cst_8 : f32 to vector<16x1xf32>
    %17 = arith.mulf %15, %16 : vector<16x1xf32>
    %cst_9 = arith.constant 9.99999974E-6 : f32
    %18 = vector.broadcast %cst_9 : f32 to vector<16x1xf32>
    %19 = arith.addf %17, %18 : vector<16x1xf32>
    %20 = math.rsqrt %19 : vector<16x1xf32>
    %21 = vector.broadcast %20 : vector<16x1xf32> to vector<16x128xf32>
    %22 = arith.mulf %12, %21 : vector<16x128xf32>
    %23 = vector.extract_strided_slice %3 {offsets = [1, 0], sizes = [1, 128], strides = [1, 1]} : vector<3x128xf32> to vector<1x128xf32>
    %24 = vector.broadcast %23 : vector<1x128xf32> to vector<16x128xf32>
    %25 = arith.mulf %22, %24 : vector<16x128xf32>
    %26 = vector.extract_strided_slice %3 {offsets = [2, 0], sizes = [1, 128], strides = [1, 1]} : vector<3x128xf32> to vector<1x128xf32>
    %27 = vector.broadcast %26 : vector<1x128xf32> to vector<16x128xf32>
    %28 = arith.addf %25, %27 : vector<16x128xf32>
    %cst_10 = arith.constant 2.000000e+01 : f32
    %29 = vector.broadcast %cst_10 : f32 to vector<16x128xf32>
    %30 = arith.minimumf %28, %29 : vector<16x128xf32>
    %31 = math.exp %30 : vector<16x128xf32>
    %cst_11 = arith.constant 2.000000e+00 : f32
    %32 = vector.broadcast %cst_11 : f32 to vector<16x128xf32>
    %33 = arith.addf %31, %32 : vector<16x128xf32>
    %34 = arith.mulf %31, %33 : vector<16x128xf32>
    %cst_12 = arith.constant 2.000000e+00 : f32
    %35 = vector.broadcast %cst_12 : f32 to vector<16x128xf32>
    %36 = arith.addf %34, %35 : vector<16x128xf32>
    %37 = tpu.reciprocal %36 {approx = true} : vector<16x128xf32> -> vector<16x128xf32>
    %38 = arith.mulf %34, %37 : vector<16x128xf32>
    %39 = arith.mulf %28, %38 : vector<16x128xf32>
    %c0_13 = arith.constant 0 : index
    %c0_14 = arith.constant 0 : index
    %40 = vector.load %arg4[%c0_13, %c0_14] : memref<16x128xf32, #tpu.memory_space<vmem>>, vector<16x128xf32>
    tpu.vector_store %arg4[%c0_13, %c0_14], %39 {strides = array<i32>} : memref<16x128xf32, #tpu.memory_space<vmem>>, vector<16x128xf32>,
    return
  }
  func.func @transform_0(%arg0: i32) -> (i32, i32) {
    %c0_i32 = arith.constant 0 : i32
    %c0_i32_0 = arith.constant 0 : i32
    return %arg0, %c0_i32 : i32, i32
  }
  func.func @transform_1(%arg0: i32) -> (i32, i32) {
    %c0_i32 = arith.constant 0 : i32
    %c0_i32_0 = arith.constant 0 : i32
    %c0_i32_1 = arith.constant 0 : i32
    return %c0_i32, %c0_i32_0 : i32, i32
  }
  func.func @transform_2(%arg0: i32) -> (i32, i32) {
    %c0_i32 = arith.constant 0 : i32
    %c0_i32_0 = arith.constant 0 : i32
    %c0_i32_1 = arith.constant 0 : i32
    return %c0_i32, %c0_i32_0 : i32, i32
  }
  func.func @transform_3(%arg0: i32) -> (i32, i32) {
    %c0_i32 = arith.constant 0 : i32
    %c0_i32_0 = arith.constant 0 : i32
    return %arg0, %c0_i32 : i32, i32
  }
}

</mosaic_0001>

<llo_original>
// kernel: tpu_custom_call.1
$region0: #{tpu_custom_call.1}
  #allocation0 [shape = 'u32[]', space=smem, size = 0x4, offset = 0x4, fixed_abs, tag = 'smem constant byte address 0x4 - core index']
  #allocation1 [shape = 'u32[72,128]{1,0:T(1,128)}', space=vmem, size = 0x9000, scoped, tag = 'internal scratch']
  %s0 = inlined_call_operand.vmem [shape: f32[64,32], index: 0, kind: input, shape index: {}]
  %s1 = inlined_call_operand.vmem [shape: f32[32,128], index: 1, kind: input, shape index: {}]
  %s2 = inlined_call_operand.vmem [shape: f32[3,128], index: 2, kind: input, shape index: {}]
  %s3 = inlined_call_operand.hbm [shape: f32[64,128], index: 3, kind: output, shape index: {}]
  %s4 = sld [smem:[#allocation0]]
  $region45: #{tpu_custom_call.1} parent=0
    _
  %s6 = ssub.s32 1, %s4
  %s7 = scalar_select 0, %s6, %s4
  $region1: #{tpu_custom_call.1} parent=0
    #allocation2 [shape = 'u8[16384]{0}', space=vmem, size = 0x4000, scoped, tag = 'output window, operand 0']
    #allocation3 [shape = 's32[2]{0}', space=sflag, size = 0x8, scoped, tag = 'scoped memory for tpu_custom_call.1']
    %8 = vsyncpa [#allocation3], 0
    %s9 = scalar_lea.sflag [#allocation3], 1
    %10 = vsyncpa %s9, 0
    loop: start=0, step=1, limit=6
    $region2: #{tpu_custom_call.1} parent=1 // loop_pre_header
      _
    $region3: #{tpu_custom_call.1} parent=1 // loop_header
      %s12 = sphi 0, %s16
      %p13 = scmp.ge.s32.totalorder %s12, 6
      %s22 = sphi 0, %s24
      %s25 = sphi 0, %s22
      %s26 = sphi 0, %s25
      %s42 = sphi 0, %s26
      %s46 = sphi 0, %s46
      %s48 = sphi 0, %s46
      %s49 = sphi 0, %s48
      %s63 = sphi 0, %s49
      %s67 = sphi 0, %s67
      %s69 = sphi 0, %s67
      %s70 = sphi 0, %s69
      %s84 = sphi 0, %s70
      %s90 = sphi 0, %s92
      %s93 = sphi 0, %s90
      %s94 = sphi 0, %s93
      %s110 = sphi 0, %s94
    $region4: #{tpu_custom_call.1} parent=1 // loop_header_branch
      %15 = sbr.rel (%p13) target = $region8
    $region5: #{tpu_custom_call.1} parent=1 // loop_body
      %s17 = ssub.s32 %s12, 1
      %s18 = ssub.s32 %s12, 2
      %s19 = sadd.s32 %s12, 1
      %s20 = ssub.s32 %s12, %s19
      %p21 = scmp.eq.s32.totalorder %s20, 0
      %s23 = sadd.s32 %s22, 1
      %s24 = scalar_select %p21, %s22, %s23
      %p27 = pneg %p21
      %p28 = scmp.eq.s32.totalorder %s12, 3
      %p29 = por %p27, %p28
      %p30 = scmp.ne.s32.totalorder %s22, %s25
      %p31 = scmp.eq.s32.totalorder %s12, 0
      %p32 = por %p30, %p31
      %p33 = scmp.ne.s32.totalorder %s22, %s25
      %p34 = scmp.eq.s32.totalorder %s17, 3
      %p35 = por %p33, %p34
      %p36 = scmp.ne.s32.totalorder %s25, %s26
      %p37 = scmp.eq.s32.totalorder %s17, 0
      %p38 = por %p36, %p37
      %p39 = scmp.ne.s32.totalorder %s25, %s26
      %p40 = scmp.eq.s32.totalorder %s18, 3
      %p41 = por %p39, %p40
      %p43 = scmp.ne.s32.totalorder %s26, %s42
      %p44 = scmp.eq.s32.totalorder %s18, 0
      %p45 = por %p43, %p44
      %s47 = sadd.s32 %s46, 1
      %p50 = scmp.eq.s32.totalorder %s12, 3
      %p51 = scmp.ne.s32.totalorder %s46, %s48
      %p52 = scmp.eq.s32.totalorder %s12, 0
      %p53 = por %p51, %p52
      %p54 = scmp.ne.s32.totalorder %s46, %s48
      %p55 = scmp.eq.s32.totalorder %s17, 3
      %p56 = por %p54, %p55
      %p57 = scmp.ne.s32.totalorder %s48, %s49
      %p58 = scmp.eq.s32.totalorder %s17, 0
      %p59 = por %p57, %p58
      %p60 = scmp.ne.s32.totalorder %s48, %s49
      %p61 = scmp.eq.s32.totalorder %s18, 3
      %p62 = por %p60, %p61
      %p64 = scmp.ne.s32.totalorder %s49, %s63
      %p65 = scmp.eq.s32.totalorder %s18, 0
      %p66 = por %p64, %p65
      %s68 = sadd.s32 %s67, 1
      %p71 = scmp.eq.s32.totalorder %s12, 3
      %p72 = scmp.ne.s32.totalorder %s67, %s69
      %p73 = scmp.eq.s32.totalorder %s12, 0
      %p74 = por %p72, %p73
      %p75 = scmp.ne.s32.totalorder %s67, %s69
      %p76 = scmp.eq.s32.totalorder %s17, 3
      %p77 = por %p75, %p76
      %p78 = scmp.ne.s32.totalorder %s69, %s70
      %p79 = scmp.eq.s32.totalorder %s17, 0
      %p80 = por %p78, %p79
      %p81 = scmp.ne.s32.totalorder %s69, %s70
      %p82 = scmp.eq.s32.totalorder %s18, 3
      %p83 = por %p81, %p82
      %p85 = scmp.ne.s32.totalorder %s70, %s84
      %p86 = scmp.eq.s32.totalorder %s18, 0
      %p87 = por %p85, %p86
      %s88 = ssub.s32 %s12, %s19
      %p89 = scmp.eq.s32.totalorder %s88, 0
      %s91 = sadd.s32 %s90, 1
      %s92 = scalar_select %p89, %s90, %s91
      %p95 = pneg %p89
      %p96 = scmp.eq.s32.totalorder %s12, 3
      %p97 = por %p95, %p96
      %p98 = scmp.ne.s32.totalorder %s90, %s93
      %p99 = scmp.eq.s32.totalorder %s12, 0
      %p100 = por %p98, %p99
      %p101 = scmp.ne.s32.totalorder %s90, %s93
      %p102 = scmp.eq.s32.totalorder %s17, 3
      %p103 = por %p101, %p102
      %p104 = scmp.ne.s32.totalorder %s93, %s94
      %p105 = scmp.eq.s32.totalorder %s17, 0
      %p106 = por %p104, %p105
      %p107 = scmp.ne.s32.totalorder %s93, %s94
      %p108 = scmp.eq.s32.totalorder %s18, 3
      %p109 = por %p107, %p108
      %p111 = scmp.ne.s32.totalorder %s94, %s110
      %p112 = scmp.eq.s32.totalorder %s18, 0
      %p113 = por %p111, %p112
      %p114 = scmp.le.s32.totalorder 1, %s12
      %p115 = scmp.lt.s32.totalorder %s12, 5
      %p116 = pnand %p114, %p115
      %p117 = pneg %p116
      // Predicated region
      $region9: #{tpu_custom_call.1} parent=5 // pred_check
        _
      $region10: #{tpu_custom_call.1} parent=5 // pred_check_branch
        %119 = sbr.rel (%p116) target = $region12
      $region11: #{tpu_custom_call.1} parent=5 // pred_region
        %s120 = ssub.s32 %s12, 1
        // Predicated region
        $region13: #{tpu_custom_call.1} parent=11 // pred_check
          %p121 = pneg %p59
        $region14: #{tpu_custom_call.1} parent=11 // pred_check_branch
          %123 = sbr.rel (%p121) target = $region16
        $region15: #{tpu_custom_call.1} parent=11 // pred_region
          _
        $region16: #{tpu_custom_call.1} parent=11 // pred_fallthru
          _
        // Predicated region
        $region17: #{tpu_custom_call.1} parent=11 // pred_check
          %p124 = pneg %p80
        $region18: #{tpu_custom_call.1} parent=11 // pred_check_branch
          %126 = sbr.rel (%p124) target = $region20
        $region19: #{tpu_custom_call.1} parent=11 // pred_region
          _
        $region20: #{tpu_custom_call.1} parent=11 // pred_fallthru
          _
      $region12: #{tpu_custom_call.1} parent=5 // pred_fallthru
        _
      %p127 = scmp.lt.s32.totalorder %s12, 4
      // Predicated region
      $region21: #{tpu_custom_call.1} parent=5 // pred_check
        %p128 = pneg %p127
      $region22: #{tpu_custom_call.1} parent=5 // pred_check_branch
        %130 = sbr.rel (%p128) target = $region24
      $region23: #{tpu_custom_call.1} parent=5 // pred_region
        // Predicated region
        $region25: #{tpu_custom_call.1} parent=23 // pred_check
          %p131 = pneg %p32
        $region26: #{tpu_custom_call.1} parent=23 // pred_check_branch
          %133 = sbr.rel (%p131) target = $region28
        $region27: #{tpu_custom_call.1} parent=23 // pred_region
          %s134 = smul.u32 2, %s12
          %p135 = scmp.lt.s32.totalorder %s134, 7
          %s136 = scalar_select %p135, %s134, 7
          %s137 = smul.addr %s136, 8
          %s138 = scalar_lea.vmem %s0, %s137
          %s139 = smul.u32 2, %s12
        $region28: #{tpu_custom_call.1} parent=23 // pred_fallthru
          _
      $region24: #{tpu_custom_call.1} parent=5 // pred_fallthru
        _
      %p140 = scmp.le.s32.totalorder 1, %s12
      %p141 = scmp.lt.s32.totalorder %s12, 5
      %p142 = pnand %p140, %p141
      %p143 = pneg %p142
      // Predicated region
      $region29: #{tpu_custom_call.1} parent=5 // pred_check
        _
      $region30: #{tpu_custom_call.1} parent=5 // pred_check_branch
        %145 = sbr.rel (%p142) target = $region32
      $region31: #{tpu_custom_call.1} parent=5 // pred_region
        %s146 = ssub.s32 %s12, 1
        %s147 = smul.u32 2, %s17
        %p148 = scmp.lt.s32.totalorder %s147, 7
        %s149 = scalar_select %p148, %s147, 7
        %s150 = smul.addr %s149, 8
        %s151 = scalar_lea.vmem %s0, %s150
        %p152 = pneg %p38
        %p153 = pneg %p35
        %p154 = pneg %p59
        %p155 = pneg %p56
        %p156 = pneg %p80
        %p157 = pneg %p77
        %p158 = pneg %p106
        %p159 = pneg %p103
        %s160 = sand.u32 %s93, 1
        %s161 = scalar_lea.sflag [#allocation3], %s160
        %s162 = sand.u32 %s93, 1
        %s163 = smul.addr %s162, 16
        %s164 = scalar_lea.vmem [#allocation2], %s163
        %s165 = smul.u32 2, %s17
        %p166 = scmp.lt.s32.totalorder %s165, 7
        %s167 = scalar_select %p166, %s165, 7
        %s168 = smul.addr %s167, 8
        %s169 = scalar_lea.vmem %s0, %s168
        %s170 = smul.u32 2, %s17
        %s171 = smul.u32 2, %s17
        %v172 = vld [vmem:[%s169] sm:$0xff]
        %v173 = vld [vmem:[%s169 + $0x8] sm:$0xff]
        %v174 = vld [vmem:[%s1] sm:$0xff]
        %v175 = vld [vmem:[%s1 + $0x8] sm:$0xff]
        %v176 = vld [vmem:[%s1 + $0x10] sm:$0xff]
        %v177 = vld [vmem:[%s1 + $0x18] sm:$0xff]
        %v178 = vld [vmem:[%s2] sm:$0x7]
        %v179 = vperm.slane %v178, 0
        %vm180 = vcmask 261120
        %v182 = vsel %vm180, %v172, 0
        %v185 = vsel %vm180, %v173, 0
        %187 = vmatpush.msra.mxu0 0.0
        %188 = vmatpush.msra.mxu0 0.0
        %189 = vmatpush.msra.mxu0 0.0
        %190 = vmatpush.msra.mxu0 0.0
        %191 = vmatpush.msra.mxu0 0.0
        %192 = vmatpush.msra.mxu0 0.0
        %193 = vmatpush.msra.mxu0 0.0
        %194 = vmatpush.msra.mxu0 0.0
        %195 = vmatpush.msra.mxu0 0.0
        %196 = vmatpush.msra.mxu0 0.0
        %197 = vmatpush.msra.mxu0 0.0
        %198 = vmatpush.msra.mxu0 0.0
        %199 = vmatpush.msra.mxu0 %v177
        %200 = vmatpush.msra.mxu0 %v176
        %201 = vmatpush.msra.mxu0 %v175
        %202 = vmatpush.msra.mxu0 %v174
        %203 = vmatmul.f32.gmra.mxu0 %v182
        %v204 = vpop.f32.mrf.mxu0
        %v205 = vadd.f32 %v179, %v204
        %206 = vmatmul.f32.gmra.mxu0 %v185
        %v207 = vpop.f32.mrf.mxu0
        %v208 = vadd.f32 %v179, %v207
        %209 = vdwg.mxu0
        %210 = vadd.xlane.f32.xlu0 %v205
        %v211 = vpop.xlane.xlu0 %210
        %212 = vadd.xlane.f32.xlu0 %v208
        %v213 = vpop.xlane.xlu0 %212
        %v214 = vmul.f32 %v211, 0.0078125
        %v215 = vmul.f32 %v213, 0.0078125
        %v216 = vsub.f32 %v205, %v214
        %v217 = vsub.f32 %v208, %v215
        %v218 = vmul.f32 %v216, %v216
        %v219 = vmul.f32 %v217, %v217
        %220 = vadd.xlane.f32.xlu0 %v218
        %v221 = vpop.xlane.xlu0 %220
        %222 = vadd.xlane.f32.xlu0 %v219
        %v223 = vpop.xlane.xlu0 %222
        %v224 = vmul.f32 %v221, 0.0078125
        %v225 = vmul.f32 %v223, 0.0078125
        %v226 = vadd.f32 %v224, 1e-05
        %v227 = vadd.f32 %v225, 1e-05
        %v228 = vrsqrt.pop %v226
        %v229 = vmul.f32 %v228, %v226
        %v230 = vmul.f32 %v229, %v228
        %v231 = vmul.f32 0.5, %v230
        %v232 = vsub.f32 1.5, %v231
        %v233 = vmul.f32 %v228, %v232
        %vm234 = vweird.f32 %v226
        %vm235 = vweird.f32 %v228
        %vm236 = vmor %vm234, %vm235
        %v237 = vsel %vm236, %v228, %v233
        %v238 = vrsqrt.pop %v227
        %v239 = vmul.f32 %v238, %v227
        %v240 = vmul.f32 %v239, %v238
        %v241 = vmul.f32 0.5, %v240
        %v242 = vsub.f32 1.5, %v241
        %v243 = vmul.f32 %v238, %v242
        %vm244 = vweird.f32 %v227
        %vm245 = vweird.f32 %v238
        %vm246 = vmor %vm244, %vm245
        %v247 = vsel %vm246, %v238, %v243
        %v248 = vmul.f32 %v216, %v237
        %v249 = vmul.f32 %v217, %v247
        %v250 = vperm.slane %v178, 1
        %v251 = vmul.f32 %v248, %v250
        %v252 = vmul.f32 %v249, %v250
        %v253 = vperm.slane %v178, 2
        %v254 = vadd.f32 %v251, %v253
        %v255 = vadd.f32 %v252, %v253
        %v256 = vmin.f32 %v254, 20.0
        %v257 = vmin.f32 %v255, 20.0
        %v258 = vmul.f32 %v256, 1.442695
        %v259 = vpow.pop %v258
        %v260 = vmul.f32 %v257, 1.442695
        %v261 = vpow.pop %v260
        %v262 = vadd.f32 %v259, 2.0
        %v263 = vadd.f32 %v261, 2.0
        %v264 = vmul.f32 %v259, %v262
        %v265 = vmul.f32 %v261, %v263
        %v266 = vadd.f32 %v264, 2.0
        %v267 = vadd.f32 %v265, 2.0
        %v268 = vrcp.pop %v266
        %v269 = vrcp.pop %v267
        %v270 = vmul.f32 %v264, %v268
        %v271 = vmul.f32 %v265, %v269
        %v272 = vmul.f32 %v254, %v270
        %v273 = vmul.f32 %v255, %v271
        %274 = vst [vmem:[%s164] sm:$0xff] %v272
        %275 = vst [vmem:[%s164 + $0x8] sm:$0xff] %v273
        %s276 = sand.u32 %s93, 1
        %s277 = scalar_lea.sflag [#allocation3], %s276
        %s278 = sand.u32 %s93, 1
        %s279 = smul.addr %s278, 16
        %s280 = scalar_lea.vmem [#allocation2], %s279
        // Predicated region
        $region33: #{tpu_custom_call.1} parent=31 // pred_check
          %p281 = pneg %p103
        $region34: #{tpu_custom_call.1} parent=31 // pred_check_branch
          %283 = sbr.rel (%p281) target = $region36
        $region35: #{tpu_custom_call.1} parent=31 // pred_region
          %s284 = smul.u32 2, %s17
          %286 = vsyncadd %s277, 0
          %s287 = smul.addr %s284, 8
          %s288 = scalar_lea.hbm %s3, %s287
          %s289 = sshll.u32 %s280, 4
          %s290 = int_to_ptr.vmem [resolvable:$true] %s289
          %s291 = sshll.u32 %s288, 4
          %s292 = int_to_ptr.hbm [resolvable:$true] %s291
          %297 = dma.vmem_to_hbm [thread:$0]  %s290, 256, %s292, %s277, 128, 128, 8
        $region36: #{tpu_custom_call.1} parent=31 // pred_fallthru
          _
      $region32: #{tpu_custom_call.1} parent=5 // pred_fallthru
        _
      %p298 = scmp.le.s32.totalorder 2, %s12
      // Predicated region
      $region37: #{tpu_custom_call.1} parent=5 // pred_check
        %p299 = pneg %p298
      $region38: #{tpu_custom_call.1} parent=5 // pred_check_branch
        %301 = sbr.rel (%p299) target = $region40
      $region39: #{tpu_custom_call.1} parent=5 // pred_region
        %s302 = ssub.s32 %s12, 2
        // Predicated region
        $region41: #{tpu_custom_call.1} parent=39 // pred_check
          %p303 = pneg %p109
        $region42: #{tpu_custom_call.1} parent=39 // pred_check_branch
          %305 = sbr.rel (%p303) target = $region44
        $region43: #{tpu_custom_call.1} parent=39 // pred_region
          %s306 = sand.u32 %s94, 1
          %s307 = scalar_lea.sflag [#allocation3], %s306
          %s308 = sand.u32 %s94, 1
          %s309 = smul.addr %s308, 16
          %s310 = scalar_lea.vmem [#allocation2], %s309
          %312 = dma.done %s307, 256
        $region44: #{tpu_custom_call.1} parent=39 // pred_fallthru
          _
      $region40: #{tpu_custom_call.1} parent=5 // pred_fallthru
        _
    $region6: #{tpu_custom_call.1} parent=1 // loop_footer
      %s16 = sadd.s32 1, %s12
    $region7: #{tpu_custom_call.1} parent=1 // loop_footer_branch
      %11 = sbr.rel target = $region3
    $region8: #{tpu_custom_call.1} parent=1 // loop_exit
      _
    %313 = vsyncpa [#allocation3], 1
    %s314 = scalar_lea.sflag [#allocation3], 1
    %315 = vsyncpa %s314, 1

// kernel: tpu_custom_call.1
$region0: #{tpu_custom_call.1}
  #allocation0 [shape = 'u32[]', space=smem, size = 0x4, offset = 0x4, fixed_abs, tag = 'smem constant byte address 0x4 - core index']
  #allocation1 [shape = 'u32[72,128]{1,0:T(1,128)}', space=vmem, size = 0x9000, scoped, tag = 'internal scratch']
  %s0 = inlined_call_operand.vmem [shape: f32[64,32], index: 0, kind: input, shape index: {}]
  %s1 = inlined_call_operand.vmem [shape: f32[32,128], index: 1, kind: input, shape index: {}]
  %s2 = inlined_call_operand.vmem [shape: f32[3,128], index: 2, kind: input, shape index: {}]
  %s3 = inlined_call_operand.hbm [shape: f32[64,128], index: 3, kind: output, shape index: {}]
  %s4 = sld [smem:[#allocation0]]
  $region45: #{tpu_custom_call.1} parent=0
    _
  %s6 = ssub.s32 1, %s4
  %s7 = scalar_select 0, %s6, %s4
  $region1: #{tpu_custom_call.1} parent=0
    #allocation2 [shape = 'u8[16384]{0}', space=vmem, size = 0x4000, scoped, tag = 'output window, operand 0']
    #allocation3 [shape = 's32[2]{0}', space=sflag, size = 0x8, scoped, tag = 'scoped memory for tpu_custom_call.1']
    %8 = vsyncpa [#allocation3], 0
    %s9 = scalar_lea.sflag [#allocation3], 1
    %10 = vsyncpa %s9, 0
    loop: start=0, step=1, limit=6
    $region2: #{tpu_custom_call.1} parent=1 // loop_pre_header
      _
    $region3: #{tpu_custom_call.1} parent=1 // loop_header
      %s12 = sphi 0, %s16
      %p13 = scmp.ge.s32.totalorder %s12, 6
      %s22 = sphi 0, %s24
      %s25 = sphi 0, %s22
      %s26 = sphi 0, %s25
      %s42 = sphi 0, %s26
      %s46 = sphi 0, %s46
      %s48 = sphi 0, %s46
      %s49 = sphi 0, %s48
      %s63 = sphi 0, %s49
      %s67 = sphi 0, %s67
      %s69 = sphi 0, %s67
      %s70 = sphi 0, %s69
      %s84 = sphi 0, %s70
      %s90 = sphi 0, %s92
      %s93 = sphi 0, %s90
      %s94 = sphi 0, %s93
      %s110 = sphi 0, %s94
    $region4: #{tpu_custom_call.1} parent=1 // loop_header_branch
      %15 = sbr.rel (%p13) target = $region8
    $region5: #{tpu_custom_call.1} parent=1 // loop_body
      %s17 = ssub.s32 %s12, 1
      %s18 = ssub.s32 %s12, 2
      %s19 = sadd.s32 %s12, 1
      %s20 = ssub.s32 %s12, %s19
      %p21 = scmp.eq.s32.totalorder %s20, 0
      %s23 = sadd.s32 %s22, 1
      %s24 = scalar_select %p21, %s22, %s23
      %p27 = pneg %p21
      %p28 = scmp.eq.s32.totalorder %s12, 3
      %p29 = por %p27, %p28
      %p30 = scmp.ne.s32.totalorder %s22, %s25
      %p31 = scmp.eq.s32.totalorder %s12, 0
      %p32 = por %p30, %p31
      %p33 = scmp.ne.s32.totalorder %s22, %s25
      %p34 = scmp.eq.s32.totalorder %s17, 3
      %p35 = por %p33, %p34
      %p36 = scmp.ne.s32.totalorder %s25, %s26
      %p37 = scmp.eq.s32.totalorder %s17, 0
      %p38 = por %p36, %p37
      %p39 = scmp.ne.s32.totalorder %s25, %s26
      %p40 = scmp.eq.s32.totalorder %s18, 3
      %p41 = por %p39, %p40
      %p43 = scmp.ne.s32.totalorder %s26, %s42
      %p44 = scmp.eq.s32.totalorder %s18, 0
      %p45 = por %p43, %p44
      %s47 = sadd.s32 %s46, 1
      %p50 = scmp.eq.s32.totalorder %s12, 3
      %p51 = scmp.ne.s32.totalorder %s46, %s48
      %p52 = scmp.eq.s32.totalorder %s12, 0
      %p53 = por %p51, %p52
      %p54 = scmp.ne.s32.totalorder %s46, %s48
      %p55 = scmp.eq.s32.totalorder %s17, 3
      %p56 = por %p54, %p55
      %p57 = scmp.ne.s32.totalorder %s48, %s49
      %p58 = scmp.eq.s32.totalorder %s17, 0
      %p59 = por %p57, %p58
      %p60 = scmp.ne.s32.totalorder %s48, %s49
      %p61 = scmp.eq.s32.totalorder %s18, 3
      %p62 = por %p60, %p61
      %p64 = scmp.ne.s32.totalorder %s49, %s63
      %p65 = scmp.eq.s32.totalorder %s18, 0
      %p66 = por %p64, %p65
      %s68 = sadd.s32 %s67, 1
      %p71 = scmp.eq.s32.totalorder %s12, 3
      %p72 = scmp.ne.s32.totalorder %s67, %s69
      %p73 = scmp.eq.s32.totalorder %s12, 0
      %p74 = por %p72, %p73
      %p75 = scmp.ne.s32.totalorder %s67, %s69
      %p76 = scmp.eq.s32.totalorder %s17, 3
      %p77 = por %p75, %p76
      %p78 = scmp.ne.s32.totalorder %s69, %s70
      %p79 = scmp.eq.s32.totalorder %s17, 0
      %p80 = por %p78, %p79
      %p81 = scmp.ne.s32.totalorder %s69, %s70
      %p82 = scmp.eq.s32.totalorder %s18, 3
      %p83 = por %p81, %p82
      %p85 = scmp.ne.s32.totalorder %s70, %s84
      %p86 = scmp.eq.s32.totalorder %s18, 0
      %p87 = por %p85, %p86
      %s88 = ssub.s32 %s12, %s19
      %p89 = scmp.eq.s32.totalorder %s88, 0
      %s91 = sadd.s32 %s90, 1
      %s92 = scalar_select %p89, %s90, %s91
      %p95 = pneg %p89
      %p96 = scmp.eq.s32.totalorder %s12, 3
      %p97 = por %p95, %p96
      %p98 = scmp.ne.s32.totalorder %s90, %s93
      %p99 = scmp.eq.s32.totalorder %s12, 0
      %p100 = por %p98, %p99
      %p101 = scmp.ne.s32.totalorder %s90, %s93
      %p102 = scmp.eq.s32.totalorder %s17, 3
      %p103 = por %p101, %p102
      %p104 = scmp.ne.s32.totalorder %s93, %s94
      %p105 = scmp.eq.s32.totalorder %s17, 0
      %p106 = por %p104, %p105
      %p107 = scmp.ne.s32.totalorder %s93, %s94
      %p108 = scmp.eq.s32.totalorder %s18, 3
      %p109 = por %p107, %p108
      %p111 = scmp.ne.s32.totalorder %s94, %s110
      %p112 = scmp.eq.s32.totalorder %s18, 0
      %p113 = por %p111, %p112
      %p114 = scmp.le.s32.totalorder 1, %s12
      %p115 = scmp.lt.s32.totalorder %s12, 5
      %p116 = pnand %p114, %p115
      %p117 = pneg %p116
      // Predicated region
      $region9: #{tpu_custom_call.1} parent=5 // pred_check
        _
      $region10: #{tpu_custom_call.1} parent=5 // pred_check_branch
        %119 = sbr.rel (%p116) target = $region12
      $region11: #{tpu_custom_call.1} parent=5 // pred_region
        %s120 = ssub.s32 %s12, 1
        // Predicated region
        $region13: #{tpu_custom_call.1} parent=11 // pred_check
          %p121 = pneg %p59
        $region14: #{tpu_custom_call.1} parent=11 // pred_check_branch
          %123 = sbr.rel (%p121) target = $region16
        $region15: #{tpu_custom_call.1} parent=11 // pred_region
          _
        $region16: #{tpu_custom_call.1} parent=11 // pred_fallthru
          _
        // Predicated region
        $region17: #{tpu_custom_call.1} parent=11 // pred_check
          %p124 = pneg %p80
        $region18: #{tpu_custom_call.1} parent=11 // pred_check_branch
          %126 = sbr.rel (%p124) target = $region20
        $region19: #{tpu_custom_call.1} parent=11 // pred_region
          _
        $region20: #{tpu_custom_call.1} parent=11 // pred_fallthru
          _
      $region12: #{tpu_custom_call.1} parent=5 // pred_fallthru
        _
      %p127 = scmp.lt.s32.totalorder %s12, 4
      // Predicated region
      $region21: #{tpu_custom_call.1} parent=5 // pred_check
        %p128 = pneg %p127
      $region22: #{tpu_custom_call.1} parent=5 // pred_check_branch
        %130 = sbr.rel (%p128) target = $region24
      $region23: #{tpu_custom_call.1} parent=5 // pred_region
        // Predicated region
        $region25: #{tpu_custom_call.1} parent=23 // pred_check
          %p131 = pneg %p32
        $region26: #{tpu_custom_call.1} parent=23 // pred_check_branch
          %133 = sbr.rel (%p131) target = $region28
        $region27: #{tpu_custom_call.1} parent=23 // pred_region
          %s134 = smul.u32 2, %s12
          %p135 = scmp.lt.s32.totalorder %s134, 7
          %s136 = scalar_select %p135, %s134, 7
          %s137 = smul.addr %s136, 8
          %s138 = scalar_lea.vmem %s0, %s137
          %s139 = smul.u32 2, %s12
        $region28: #{tpu_custom_call.1} parent=23 // pred_fallthru
          _
      $region24: #{tpu_custom_call.1} parent=5 // pred_fallthru
        _
      %p140 = scmp.le.s32.totalorder 1, %s12
      %p141 = scmp.lt.s32.totalorder %s12, 5
      %p142 = pnand %p140, %p141
      %p143 = pneg %p142
      // Predicated region
      $region29: #{tpu_custom_call.1} parent=5 // pred_check
        _
      $region30: #{tpu_custom_call.1} parent=5 // pred_check_branch
        %145 = sbr.rel (%p142) target = $region32
      $region31: #{tpu_custom_call.1} parent=5 // pred_region
        %s146 = ssub.s32 %s12, 1
        %s147 = smul.u32 2, %s17
        %p148 = scmp.lt.s32.totalorder %s147, 7
        %s149 = scalar_select %p148, %s147, 7
        %s150 = smul.addr %s149, 8
        %s151 = scalar_lea.vmem %s0, %s150
        %p152 = pneg %p38
        %p153 = pneg %p35
        %p154 = pneg %p59
        %p155 = pneg %p56
        %p156 = pneg %p80
        %p157 = pneg %p77
        %p158 = pneg %p106
        %p159 = pneg %p103
        %s160 = sand.u32 %s93, 1
        %s161 = scalar_lea.sflag [#allocation3], %s160
        %s162 = sand.u32 %s93, 1
        %s163 = smul.addr %s162, 16
        %s164 = scalar_lea.vmem [#allocation2], %s163
        %s165 = smul.u32 2, %s17
        %p166 = scmp.lt.s32.totalorder %s165, 7
        %s167 = scalar_select %p166, %s165, 7
        %s168 = smul.addr %s167, 8
        %s169 = scalar_lea.vmem %s0, %s168
        %s170 = smul.u32 2, %s17
        %s171 = smul.u32 2, %s17
        %v172 = vld [vmem:[%s169] sm:$0xff]
        %v173 = vld [vmem:[%s169 + $0x8] sm:$0xff]
        %v174 = vld [vmem:[%s1] sm:$0xff]
        %v175 = vld [vmem:[%s1 + $0x8] sm:$0xff]
        %v176 = vld [vmem:[%s1 + $0x10] sm:$0xff]
        %v177 = vld [vmem:[%s1 + $0x18] sm:$0xff]
        %v178 = vld [vmem:[%s2] sm:$0x7]
        %v179 = vperm.slane %v178, 0
        %vm180 = vcmask 261120
        %v182 = vsel %vm180, %v172, 0
        %v185 = vsel %vm180, %v173, 0
        %187 = vmatpush.msra.mxu0 0.0
        %188 = vmatpush.msra.mxu0 0.0
        %189 = vmatpush.msra.mxu0 0.0
        %190 = vmatpush.msra.mxu0 0.0
        %191 = vmatpush.msra.mxu0 0.0
        %192 = vmatpush.msra.mxu0 0.0
        %193 = vmatpush.msra.mxu0 0.0
        %194 = vmatpush.msra.mxu0 0.0
        %195 = vmatpush.msra.mxu0 0.0
        %196 = vmatpush.msra.mxu0 0.0
        %197 = vmatpush.msra.mxu0 0.0
        %198 = vmatpush.msra.mxu0 0.0
        %199 = vmatpush.msra.mxu0 %v177
        %200 = vmatpush.msra.mxu0 %v176
        %201 = vmatpush.msra.mxu0 %v175
        %202 = vmatpush.msra.mxu0 %v174
        %203 = vmatmul.f32.gmra.mxu0 %v182
        %v204 = vpop.f32.mrf.mxu0
        %v205 = vadd.f32 %v179, %v204
        %206 = vmatmul.f32.gmra.mxu0 %v185
        %v207 = vpop.f32.mrf.mxu0
        %v208 = vadd.f32 %v179, %v207
        %209 = vdwg.mxu0
        %210 = vadd.xlane.f32.xlu0 %v205
        %v211 = vpop.xlane.xlu0 %210
        %212 = vadd.xlane.f32.xlu0 %v208
        %v213 = vpop.xlane.xlu0 %212
        %v214 = vmul.f32 %v211, 0.0078125
        %v215 = vmul.f32 %v213, 0.0078125
        %v216 = vsub.f32 %v205, %v214
        %v217 = vsub.f32 %v208, %v215
        %v218 = vmul.f32 %v216, %v216
        %v219 = vmul.f32 %v217, %v217
        %220 = vadd.xlane.f32.xlu0 %v218
        %v221 = vpop.xlane.xlu0 %220
        %222 = vadd.xlane.f32.xlu0 %v219
        %v223 = vpop.xlane.xlu0 %222
        %v224 = vmul.f32 %v221, 0.0078125
        %v225 = vmul.f32 %v223, 0.0078125
        %v226 = vadd.f32 %v224, 1e-05
        %v227 = vadd.f32 %v225, 1e-05
        %v228 = vrsqrt.pop %v226
        %v229 = vmul.f32 %v228, %v226
        %v230 = vmul.f32 %v229, %v228
        %v231 = vmul.f32 0.5, %v230
        %v232 = vsub.f32 1.5, %v231
        %v233 = vmul.f32 %v228, %v232
        %vm234 = vweird.f32 %v226
        %vm235 = vweird.f32 %v228
        %vm236 = vmor %vm234, %vm235
        %v237 = vsel %vm236, %v228, %v233
        %v238 = vrsqrt.pop %v227
        %v239 = vmul.f32 %v238, %v227
        %v240 = vmul.f32 %v239, %v238
        %v241 = vmul.f32 0.5, %v240
        %v242 = vsub.f32 1.5, %v241
        %v243 = vmul.f32 %v238, %v242
        %vm244 = vweird.f32 %v227
        %vm245 = vweird.f32 %v238
        %vm246 = vmor %vm244, %vm245
        %v247 = vsel %vm246, %v238, %v243
        %v248 = vmul.f32 %v216, %v237
        %v249 = vmul.f32 %v217, %v247
        %v250 = vperm.slane %v178, 1
        %v251 = vmul.f32 %v248, %v250
        %v252 = vmul.f32 %v249, %v250
        %v253 = vperm.slane %v178, 2
        %v254 = vadd.f32 %v251, %v253
        %v255 = vadd.f32 %v252, %v253
        %v256 = vmin.f32 %v254, 20.0
        %v257 = vmin.f32 %v255, 20.0
        %v258 = vmul.f32 %v256, 1.442695
        %v259 = vpow.pop %v258
        %v260 = vmul.f32 %v257, 1.442695
        %v261 = vpow.pop %v260
        %v262 = vadd.f32 %v259, 2.0
        %v263 = vadd.f32 %v261, 2.0
        %v264 = vmul.f32 %v259, %v262
        %v265 = vmul.f32 %v261, %v263
        %v266 = vadd.f32 %v264, 2.0
        %v267 = vadd.f32 %v265, 2.0
        %v268 = vrcp.pop %v266
        %v269 = vrcp.pop %v267
        %v270 = vmul.f32 %v264, %v268
        %v271 = vmul.f32 %v265, %v269
        %v272 = vmul.f32 %v254, %v270
        %v273 = vmul.f32 %v255, %v271
        %274 = vst [vmem:[%s164] sm:$0xff] %v272
        %275 = vst [vmem:[%s164 + $0x8] sm:$0xff] %v273
        %s276 = sand.u32 %s93, 1
        %s277 = scalar_lea.sflag [#allocation3], %s276
        %s278 = sand.u32 %s93, 1
        %s279 = smul.addr %s278, 16
        %s280 = scalar_lea.vmem [#allocation2], %s279
        // Predicated region
        $region33: #{tpu_custom_call.1} parent=31 // pred_check
          %p281 = pneg %p103
        $region34: #{tpu_custom_call.1} parent=31 // pred_check_branch
          %283 = sbr.rel (%p281) target = $region36
        $region35: #{tpu_custom_call.1} parent=31 // pred_region
          %s284 = smul.u32 2, %s17
          %286 = vsyncadd %s277, 0
          %s287 = smul.addr %s284, 8
          %s288 = scalar_lea.hbm %s3, %s287
          %s289 = sshll.u32 %s280, 4
          %s290 = int_to_ptr.vmem [resolvable:$true] %s289
          %s291 = sshll.u32 %s288, 4
          %s292 = int_to_ptr.hbm [resolvable:$true] %s291
          %297 = dma.vmem_to_hbm [thread:$0]  %s290, 256, %s292, %s277, 128, 128, 8
        $region36: #{tpu_custom_call.1} parent=31 // pred_fallthru
          _
      $region32: #{tpu_custom_call.1} parent=5 // pred_fallthru
        _
      %p298 = scmp.le.s32.totalorder 2, %s12
      // Predicated region
      $region37: #{tpu_custom_call.1} parent=5 // pred_check
        %p299 = pneg %p298
      $region38: #{tpu_custom_call.1} parent=5 // pred_check_branch
        %301 = sbr.rel (%p299) target = $region40
      $region39: #{tpu_custom_call.1} parent=5 // pred_region
        %s302 = ssub.s32 %s12, 2
        // Predicated region
        $region41: #{tpu_custom_call.1} parent=39 // pred_check
          %p303 = pneg %p109
        $region42: #{tpu_custom_call.1} parent=39 // pred_check_branch
          %305 = sbr.rel (%p303) target = $region44
        $region43: #{tpu_custom_call.1} parent=39 // pred_region
          %s306 = sand.u32 %s94, 1
          %s307 = scalar_lea.sflag [#allocation3], %s306
          %s308 = sand.u32 %s94, 1
          %s309 = smul.addr %s308, 16
          %s310 = scalar_lea.vmem [#allocation2], %s309
          %312 = dma.done %s307, 256
        $region44: #{tpu_custom_call.1} parent=39 // pred_fallthru
          _
      $region40: #{tpu_custom_call.1} parent=5 // pred_fallthru
        _
    $region6: #{tpu_custom_call.1} parent=1 // loop_footer
      %s16 = sadd.s32 1, %s12
    $region7: #{tpu_custom_call.1} parent=1 // loop_footer_branch
      %11 = sbr.rel target = $region3
    $region8: #{tpu_custom_call.1} parent=1 // loop_exit
      _
    %313 = vsyncpa [#allocation3], 1
    %s314 = scalar_lea.sflag [#allocation3], 1
    %315 = vsyncpa %s314, 1

</llo_original>
